<compile_context>
chip_gen: v5e
topology: v5e:2x2
jax: 0.10.0
libtpu: 0.0.40
codegen_flags: <defaults>
</compile_context>

<pallas_src>
import math

import jax
import jax.numpy as jnp
from jax.experimental import pallas as pl
from jax.experimental.pallas import tpu as pltpu  # noqa: F401  (TPU backend)

# ---- config (small, BERT-like) ----
BATCH = 2
SEQ = 8
HIDDEN = 32
NUM_HEADS = 4
HEAD_DIM = HIDDEN // NUM_HEADS
LN_EPS = 1e-12


def bert_attention_kernel(x_ref, w_ref, p_ref, mask_ref, o_ref):
    # Single invocation: refs hold the full (VMEM-resident) arrays.
    x = x_ref[...]        # (B*S, H)      = (16, 32)  f32
    w = w_ref[...]        # (H, 4H)       = (32, 128) [wq | wk | wv | wo]
    p = p_ref[...]        # (2, 4H)       = (2, 128)  [bq|bk|bv|bo ; g|b|0|0]
    mask = mask_ref[...]  # (B*S, B*S)    = (16, 16)  additive, block-diag

    wqkv = w[:, : 3 * HIDDEN]             # (32, 96)
    wo = w[:, 3 * HIDDEN:]                # (32, 32)
    bqkv = p[0:1, : 3 * HIDDEN]           # (1, 96)
    bo = p[0:1, 3 * HIDDEN: 4 * HIDDEN]   # (1, 32)
    gamma = p[1:2, :HIDDEN]               # (1, 32)
    beta = p[1:2, HIDDEN: 2 * HIDDEN]     # (1, 32)

    # Fused Q/K/V projection: one (16,32)x(32,96) MXU matmul.
    qkv = jnp.dot(x, wqkv, preferred_element_type=jnp.float32) + bqkv  # (16,96)

    scale = 1.0 / math.sqrt(HEAD_DIM)

    # Per-head attention, fully 2D over the flattened token axis.  The
    # block-diagonal mask (added before the row-max subtraction, finite value)
    # zeroes cross-batch probabilities exactly (exp underflow), so each row's
    # softmax equals the per-batch softmax of the reference.
    ctx_parts = []
    for h in range(NUM_HEADS):
        lo = h * HEAD_DIM
        hi = (h + 1) * HEAD_DIM
        q_h = qkv[:, lo:hi]                              # (16, 8)
        k_h = qkv[:, HIDDEN + lo: HIDDEN + hi]           # (16, 8)
        v_h = qkv[:, 2 * HIDDEN + lo: 2 * HIDDEN + hi]   # (16, 8)

        s_h = jnp.einsum("qd,kd->qk", q_h, k_h,
                         preferred_element_type=jnp.float32) * scale + mask
        s_h = s_h - jnp.max(s_h, axis=-1, keepdims=True)
        e_h = jnp.exp(s_h)
        inv = pl.reciprocal(jnp.sum(e_h, axis=-1, keepdims=True), approx=False)
        probs_h = e_h * inv
        # TODO(synk): attention-probs dropout skipped (eval mode / identity).

        ctx_parts.append(jnp.dot(probs_h, v_h,
                                 preferred_element_type=jnp.float32))  # (16,8)

    ctx = jnp.concatenate(ctx_parts, axis=-1)            # (16, 32)

    # BertSelfOutput: dense -> (dropout: identity) -> residual -> LayerNorm.
    out = jnp.dot(ctx, wo, preferred_element_type=jnp.float32) + bo
    y = out + x
    mu = jnp.mean(y, axis=-1, keepdims=True)
    var = jnp.mean((y - mu) ** 2, axis=-1, keepdims=True)
    y_norm = (y - mu) * jax.lax.rsqrt(var + LN_EPS)
    o_ref[...] = (y_norm * gamma + beta).astype(o_ref.dtype)


def bert_attention(x, attn_mask, params):
    """x: (B, S, H) f32; attn_mask: (B, 1, S) additive f32."""
    B, S, H = x.shape

    # --- wrapper-side layout plumbing (free relative to the kernel) ---
    x2d = x.reshape(B * S, H)

    # One lane-dense (32,128) weight slab and one (2,128) small-params slab.
    wslab = jnp.concatenate(
        [params["wq"], params["wk"], params["wv"], params["wo"]], axis=1)
    prow0 = jnp.concatenate(
        [params["bq"], params["bk"], params["bv"], params["bo"]], axis=1)
    prow1 = jnp.concatenate(
        [params["gamma"], params["beta"], jnp.zeros((1, 2 * H), jnp.float32)],
        axis=1)
    pslab = jnp.concatenate([prow0, prow1], axis=0)

    # Single (B*S, B*S) additive mask: key-padding mask on the in-batch
    # diagonal blocks, finite -1e9 on cross-batch blocks.
    batch_ids = jnp.repeat(jnp.arange(B), S)                     # (B*S,)
    same_batch = batch_ids[:, None] == batch_ids[None, :]        # (B*S, B*S)
    key_add = jnp.reshape(attn_mask[:, 0, :], (B * S,))          # (B*S,)
    mask2d = jnp.where(same_batch, key_add[None, :],
                       jnp.float32(-1e9)).astype(jnp.float32)

    out2d = pl.pallas_call(
        bert_attention_kernel,
        out_shape=jax.ShapeDtypeStruct((B * S, H), x.dtype),
    )(x2d, wslab, pslab, mask2d)

    return out2d.reshape(B, S, H)


def reference(x, attn_mask, params):
    """Pure-JAX reference matching the PyTorch module (eval mode)."""
    B, S, H = x.shape
    q = x @ params["wq"] + params["bq"][0]
    k = x @ params["wk"] + params["bk"][0]
    v = x @ params["wv"] + params["bv"][0]

    def split(t):  # (B,S,H) -> (B, nh, S, hd)
        return t.reshape(B, S, NUM_HEADS, HEAD_DIM).transpose(0, 2, 1, 3)

    qh, kh, vh = split(q), split(k), split(v)
    scores = jnp.einsum("bhqd,bhkd->bhqk", qh, kh) / math.sqrt(HEAD_DIM)
    scores = scores + attn_mask[:, :, None, :]  # (B,1,1,S) style broadcast
    probs = jax.nn.softmax(scores, axis=-1)
    ctx = jnp.einsum("bhqk,bhkd->bhqd", probs, vh)
    ctx = ctx.transpose(0, 2, 1, 3).reshape(B, S, H)

    out = ctx @ params["wo"] + params["bo"][0]
    y = out + x
    mu = jnp.mean(y, axis=-1, keepdims=True)
    var = jnp.mean((y - mu) ** 2, axis=-1, keepdims=True)
    return ((y - mu) * jax.lax.rsqrt(var + LN_EPS) * params["gamma"][0]
            + params["beta"][0])


def init_params(key):
    ks = jax.random.split(key, 8)
    std = 0.02
    return {
        "wq": jax.random.normal(ks[0], (HIDDEN, HIDDEN), jnp.float32) * std,
        "wk": jax.random.normal(ks[1], (HIDDEN, HIDDEN), jnp.float32) * std,
        "wv": jax.random.normal(ks[2], (HIDDEN, HIDDEN), jnp.float32) * std,
        "wo": jax.random.normal(ks[3], (HIDDEN, HIDDEN), jnp.float32) * std,
        "bq": jax.random.normal(ks[4], (1, HIDDEN), jnp.float32) * std,
        "bk": jax.random.normal(ks[5], (1, HIDDEN), jnp.float32) * std,
        "bv": jax.random.normal(ks[6], (1, HIDDEN), jnp.float32) * std,
        "bo": jax.random.normal(ks[7], (1, HIDDEN), jnp.float32) * std,
        "gamma": jnp.ones((1, HIDDEN), jnp.float32),
        "beta": jnp.zeros((1, HIDDEN), jnp.float32),
    }


if __name__ == "__main__":
    key = jax.random.PRNGKey(0)
    k_x, k_m, k_p = jax.random.split(key, 3)

    x = jax.random.normal(k_x, (BATCH, SEQ, HIDDEN), jnp.float32)

    # Additive mask: last two key positions of batch 1 masked out (BERT-style).
    attn_mask = jnp.zeros((BATCH, 1, SEQ), jnp.float32).at[1, 0, -2:].set(-10000.0)

    params = init_params(k_p)

    out = jax.block_until_ready(bert_attention(x, attn_mask, params))

    ref = reference(x, attn_mask, params)
    assert jnp.allclose(out, ref, atol=1e-4, rtol=1e-4), (
        float(jnp.max(jnp.abs(out - ref))))

    print("KERNEL_OK")
</pallas_src>

<mosaic_0001>
module attributes {stable_mosaic.version = 11 : i64} {
  func.func @bert_attention_kernel(%arg0: memref<16x32xf32, #tpu.memory_space<vmem>>, %arg1: memref<32x128xf32, #tpu.memory_space<vmem>>, %arg2: memref<2x128xf32, #tpu.memory_space<vmem>>, %arg3: memref<16x16xf32, #tpu.memory_space<vmem>>, %arg4: memref<16x32xf32, #tpu.memory_space<vmem>>) attributes {dimension_semantics = [], scalar_prefetch = 0 : i64, scratch_operands = 0 : i64, tpu.core_type = #tpu.core_type<tc>} {
    %c0 = arith.constant 0 : index
    %c0_0 = arith.constant 0 : index
    %0 = vector.load %arg0[%c0, %c0_0] : memref<16x32xf32, #tpu.memory_space<vmem>>, vector<16x32xf32>
    %c0_1 = arith.constant 0 : index
    %c0_2 = arith.constant 0 : index
    %1 = vector.load %arg1[%c0_1, %c0_2] : memref<32x128xf32, #tpu.memory_space<vmem>>, vector<32x128xf32>
    %c0_3 = arith.constant 0 : index
    %c0_4 = arith.constant 0 : index
    %2 = vector.load %arg2[%c0_3, %c0_4] : memref<2x128xf32, #tpu.memory_space<vmem>>, vector<2x128xf32>
    %c0_5 = arith.constant 0 : index
    %c0_6 = arith.constant 0 : index
    %3 = vector.load %arg3[%c0_5, %c0_6] : memref<16x16xf32, #tpu.memory_space<vmem>>, vector<16x16xf32>
    %4 = vector.extract_strided_slice %1 {offsets = [0, 0], sizes = [32, 96], strides = [1, 1]} : vector<32x128xf32> to vector<32x96xf32>
    %5 = vector.extract_strided_slice %1 {offsets = [0, 96], sizes = [32, 32], strides = [1, 1]} : vector<32x128xf32> to vector<32x32xf32>
    %6 = vector.extract_strided_slice %2 {offsets = [0, 0], sizes = [1, 96], strides = [1, 1]} : vector<2x128xf32> to vector<1x96xf32>
    %7 = vector.extract_strided_slice %2 {offsets = [0, 96], sizes = [1, 32], strides = [1, 1]} : vector<2x128xf32> to vector<1x32xf32>
    %8 = vector.extract_strided_slice %2 {offsets = [1, 0], sizes = [1, 32], strides = [1, 1]} : vector<2x128xf32> to vector<1x32xf32>
    %9 = vector.extract_strided_slice %2 {offsets = [1, 32], sizes = [1, 32], strides = [1, 1]} : vector<2x128xf32> to vector<1x32xf32>
    %cst = arith.constant dense<0.000000e+00> : vector<16x96xf32>
    %10 = tpu.matmul %0, %4, %cst {dimension_numbers = #tpu.dot_dimension_numbers<[1], [0], [0], [1], [0, 0, 1, 1], [], []>} : vector<16x32xf32>, vector<32x96xf32>, vector<16x96xf32> -> vector<16x96xf32>
    %11 = vector.broadcast %6 : vector<1x96xf32> to vector<16x96xf32>
    %12 = arith.addf %10, %11 : vector<16x96xf32>
    %13 = vector.extract_strided_slice %12 {offsets = [0, 0], sizes = [16, 8], strides = [1, 1]} : vector<16x96xf32> to vector<16x8xf32>
    %14 = vector.extract_strided_slice %12 {offsets = [0, 32], sizes = [16, 8], strides = [1, 1]} : vector<16x96xf32> to vector<16x8xf32>
    %15 = vector.extract_strided_slice %12 {offsets = [0, 64], sizes = [16, 8], strides = [1, 1]} : vector<16x96xf32> to vector<16x8xf32>
    "tpu.trace_start"() <{level = 10 : i32, message = "qd,kd->qk"}> : () -> ()
    %cst_7 = arith.constant dense<0.000000e+00> : vector<16x16xf32>
    %16 = tpu.matmul %13, %14, %cst_7 {dimension_numbers = #tpu.dot_dimension_numbers<[1], [1], [0], [0], [0, 0, 1, 0], [], []>} : vector<16x8xf32>, vector<16x8xf32>, vector<16x16xf32> -> vector<16x16xf32>
    "tpu.trace_stop"() : () -> ()
    %cst_8 = arith.constant 0.353553385 : f32
    %17 = vector.broadcast %cst_8 : f32 to vector<16x16xf32>
    %18 = arith.mulf %16, %17 : vector<16x16xf32>
    %19 = arith.addf %18, %3 : vector<16x16xf32>
    %cst_9 = arith.constant dense<0xFF800000> : vector<16xf32>
    %20 = vector.multi_reduction <maximumf>, %19, %cst_9 [1] : vector<16x16xf32> to vector<16xf32>
    %21 = vector.shape_cast %20 : vector<16xf32> to vector<16x1xf32>
    %22 = vector.broadcast %21 : vector<16x1xf32> to vector<16x16xf32>
    %23 = arith.subf %19, %22 : vector<16x16xf32>
    %24 = math.exp %23 : vector<16x16xf32>
    %cst_10 = arith.constant dense<0.000000e+00> : vector<16xf32>
    %25 = vector.multi_reduction <add>, %24, %cst_10 [1] : vector<16x16xf32> to vector<16xf32>
    %26 = vector.shape_cast %25 : vector<16xf32> to vector<16x1xf32>
    %27 = tpu.reciprocal %26 : vector<16x1xf32> -> vector<16x1xf32>
    %28 = vector.broadcast %27 : vector<16x1xf32> to vector<16x16xf32>
    %29 = arith.mulf %24, %28 : vector<16x16xf32>
    %cst_11 = arith.constant dense<0.000000e+00> : vector<16x8xf32>
    %30 = tpu.matmul %29, %15, %cst_11 {dimension_numbers = #tpu.dot_dimension_numbers<[1], [0], [0], [1], [0, 0, 1, 1], [], []>} : vector<16x16xf32>, vector<16x8xf32>, vector<16x8xf32> -> vector<16x8xf32>
    %31 = vector.extract_strided_slice %12 {offsets = [0, 8], sizes = [16, 8], strides = [1, 1]} : vector<16x96xf32> to vector<16x8xf32>
    %32 = vector.extract_strided_slice %12 {offsets = [0, 40], sizes = [16, 8], strides = [1, 1]} : vector<16x96xf32> to vector<16x8xf32>
    %33 = vector.extract_strided_slice %12 {offsets = [0, 72], sizes = [16, 8], strides = [1, 1]} : vector<16x96xf32> to vector<16x8xf32>
    "tpu.trace_start"() <{level = 10 : i32, message = "qd,kd->qk"}> : () -> ()
    %cst_12 = arith.constant dense<0.000000e+00> : vector<16x16xf32>
    %34 = tpu.matmul %31, %32, %cst_12 {dimension_numbers = #tpu.dot_dimension_numbers<[1], [1], [0], [0], [0, 0, 1, 0], [], []>} : vector<16x8xf32>, vector<16x8xf32>, vector<16x16xf32> -> vector<16x16xf32>
    "tpu.trace_stop"() : () -> ()
    %cst_13 = arith.constant 0.353553385 : f32
    %35 = vector.broadcast %cst_13 : f32 to vector<16x16xf32>
    %36 = arith.mulf %34, %35 : vector<16x16xf32>
    %37 = arith.addf %36, %3 : vector<16x16xf32>
    %cst_14 = arith.constant dense<0xFF800000> : vector<16xf32>
    %38 = vector.multi_reduction <maximumf>, %37, %cst_14 [1] : vector<16x16xf32> to vector<16xf32>
    %39 = vector.shape_cast %38 : vector<16xf32> to vector<16x1xf32>
    %40 = vector.broadcast %39 : vector<16x1xf32> to vector<16x16xf32>
    %41 = arith.subf %37, %40 : vector<16x16xf32>
    %42 = math.exp %41 : vector<16x16xf32>
    %cst_15 = arith.constant dense<0.000000e+00> : vector<16xf32>
    %43 = vector.multi_reduction <add>, %42, %cst_15 [1] : vector<16x16xf32> to vector<16xf32>
    %44 = vector.shape_cast %43 : vector<16xf32> to vector<16x1xf32>
    %45 = tpu.reciprocal %44 : vector<16x1xf32> -> vector<16x1xf32>
    %46 = vector.broadcast %45 : vector<16x1xf32> to vector<16x16xf32>
    %47 = arith.mulf %42, %46 : vector<16x16xf32>
    %cst_16 = arith.constant dense<0.000000e+00> : vector<16x8xf32>
    %48 = tpu.matmul %47, %33, %cst_16 {dimension_numbers = #tpu.dot_dimension_numbers<[1], [0], [0], [1], [0, 0, 1, 1], [], []>} : vector<16x16xf32>, vector<16x8xf32>, vector<16x8xf32> -> vector<16x8xf32>
    %49 = vector.extract_strided_slice %12 {offsets = [0, 16], sizes = [16, 8], strides = [1, 1]} : vector<16x96xf32> to vector<16x8xf32>
    %50 = vector.extract_strided_slice %12 {offsets = [0, 48], sizes = [16, 8], strides = [1, 1]} : vector<16x96xf32> to vector<16x8xf32>
    %51 = vector.extract_strided_slice %12 {offsets = [0, 80], sizes = [16, 8], strides = [1, 1]} : vector<16x96xf32> to vector<16x8xf32>
    "tpu.trace_start"() <{level = 10 : i32, message = "qd,kd->qk"}> : () -> ()
    %cst_17 = arith.constant dense<0.000000e+00> : vector<16x16xf32>
    %52 = tpu.matmul %49, %50, %cst_17 {dimension_numbers = #tpu.dot_dimension_numbers<[1], [1], [0], [0], [0, 0, 1, 0], [], []>} : vector<16x8xf32>, vector<16x8xf32>, vector<16x16xf32> -> vector<16x16xf32>
    "tpu.trace_stop"() : () -> ()
    %cst_18 = arith.constant 0.353553385 : f32
    %53 = vector.broadcast %cst_18 : f32 to vector<16x16xf32>
    %54 = arith.mulf %52, %53 : vector<16x16xf32>
    %55 = arith.addf %54, %3 : vector<16x16xf32>
    %cst_19 = arith.constant dense<0xFF800000> : vector<16xf32>
    %56 = vector.multi_reduction <maximumf>, %55, %cst_19 [1] : vector<16x16xf32> to vector<16xf32>
    %57 = vector.shape_cast %56 : vector<16xf32> to vector<16x1xf32>
    %58 = vector.broadcast %57 : vector<16x1xf32> to vector<16x16xf32>
    %59 = arith.subf %55, %58 : vector<16x16xf32>
    %60 = math.exp %59 : vector<16x16xf32>
    %cst_20 = arith.constant dense<0.000000e+00> : vector<16xf32>
    %61 = vector.multi_reduction <add>, %60, %cst_20 [1] : vector<16x16xf32> to vector<16xf32>
    %62 = vector.shape_cast %61 : vector<16xf32> to vector<16x1xf32>
    %63 = tpu.reciprocal %62 : vector<16x1xf32> -> vector<16x1xf32>
    %64 = vector.broadcast %63 : vector<16x1xf32> to vector<16x16xf32>
    %65 = arith.mulf %60, %64 : vector<16x16xf32>
    %cst_21 = arith.constant dense<0.000000e+00> : vector<16x8xf32>
    %66 = tpu.matmul %65, %51, %cst_21 {dimension_numbers = #tpu.dot_dimension_numbers<[1], [0], [0], [1], [0, 0, 1, 1], [], []>} : vector<16x16xf32>, vector<16x8xf32>, vector<16x8xf32> -> vector<16x8xf32>
    %67 = vector.extract_strided_slice %12 {offsets = [0, 24], sizes = [16, 8], strides = [1, 1]} : vector<16x96xf32> to vector<16x8xf32>
    %68 = vector.extract_strided_slice %12 {offsets = [0, 56], sizes = [16, 8], strides = [1, 1]} : vector<16x96xf32> to vector<16x8xf32>
    %69 = vector.extract_strided_slice %12 {offsets = [0, 88], sizes = [16, 8], strides = [1, 1]} : vector<16x96xf32> to vector<16x8xf32>
    "tpu.trace_start"() <{level = 10 : i32, message = "qd,kd->qk"}> : () -> ()
    %cst_22 = arith.constant dense<0.000000e+00> : vector<16x16xf32>
    %70 = tpu.matmul %67, %68, %cst_22 {dimension_numbers = #tpu.dot_dimension_numbers<[1], [1], [0], [0], [0, 0, 1, 0], [], []>} : vector<16x8xf32>, vector<16x8xf32>, vector<16x16xf32> -> vector<16x16xf32>
    "tpu.trace_stop"() : () -> ()
    %cst_23 = arith.constant 0.353553385 : f32
    %71 = vector.broadcast %cst_23 : f32 to vector<16x16xf32>
    %72 = arith.mulf %70, %71 : vector<16x16xf32>
    %73 = arith.addf %72, %3 : vector<16x16xf32>
    %cst_24 = arith.constant dense<0xFF800000> : vector<16xf32>
    %74 = vector.multi_reduction <maximumf>, %73, %cst_24 [1] : vector<16x16xf32> to vector<16xf32>
    %75 = vector.shape_cast %74 : vector<16xf32> to vector<16x1xf32>
    %76 = vector.broadcast %75 : vector<16x1xf32> to vector<16x16xf32>
    %77 = arith.subf %73, %76 : vector<16x16xf32>
    %78 = math.exp %77 : vector<16x16xf32>
    %cst_25 = arith.constant dense<0.000000e+00> : vector<16xf32>
    %79 = vector.multi_reduction <add>, %78, %cst_25 [1] : vector<16x16xf32> to vector<16xf32>
    %80 = vector.shape_cast %79 : vector<16xf32> to vector<16x1xf32>
    %81 = tpu.reciprocal %80 : vector<16x1xf32> -> vector<16x1xf32>
    %82 = vector.broadcast %81 : vector<16x1xf32> to vector<16x16xf32>
    %83 = arith.mulf %78, %82 : vector<16x16xf32>
    %cst_26 = arith.constant dense<0.000000e+00> : vector<16x8xf32>
    %84 = tpu.matmul %83, %69, %cst_26 {dimension_numbers = #tpu.dot_dimension_numbers<[1], [0], [0], [1], [0, 0, 1, 1], [], []>} : vector<16x16xf32>, vector<16x8xf32>, vector<16x8xf32> -> vector<16x8xf32>
    %85 = tpu.concatenate %30, %48, %66, %84 in 1 : vector<16x8xf32>, vector<16x8xf32>, vector<16x8xf32>, vector<16x8xf32> -> vector<16x32xf32>
    %cst_27 = arith.constant dense<0.000000e+00> : vector<16x32xf32>
    %86 = tpu.matmul %85, %5, %cst_27 {dimension_numbers = #tpu.dot_dimension_numbers<[1], [0], [0], [1], [0, 0, 1, 1], [], []>} : vector<16x32xf32>, vector<32x32xf32>, vector<16x32xf32> -> vector<16x32xf32>
    %87 = vector.broadcast %7 : vector<1x32xf32> to vector<16x32xf32>
    %88 = arith.addf %86, %87 : vector<16x32xf32>
    %89 = arith.addf %88, %0 : vector<16x32xf32>
    %cst_28 = arith.constant dense<0.000000e+00> : vector<16xf32>
    %90 = vector.multi_reduction <add>, %89, %cst_28 [1] : vector<16x32xf32> to vector<16xf32>
    %91 = vector.shape_cast %90 : vector<16xf32> to vector<16x1xf32>
    %cst_29 = arith.constant 3.200000e+01 : f32
    %92 = vector.broadcast %cst_29 : f32 to vector<16x1xf32>
    %93 = arith.divf %91, %92 : vector<16x1xf32>
    %94 = vector.broadcast %93 : vector<16x1xf32> to vector<16x32xf32>
    %95 = arith.subf %89, %94 : vector<16x32xf32>
    %96 = arith.mulf %95, %95 : vector<16x32xf32>
    %cst_30 = arith.constant dense<0.000000e+00> : vector<16xf32>
    %97 = vector.multi_reduction <add>, %96, %cst_30 [1] : vector<16x32xf32> to vector<16xf32>
    %98 = vector.shape_cast %97 : vector<16xf32> to vector<16x1xf32>
    %cst_31 = arith.constant 3.200000e+01 : f32
    %99 = vector.broadcast %cst_31 : f32 to vector<16x1xf32>
    %100 = arith.divf %98, %99 : vector<16x1xf32>
    %101 = vector.broadcast %93 : vector<16x1xf32> to vector<16x32xf32>
    %102 = arith.subf %89, %101 : vector<16x32xf32>
    %cst_32 = arith.constant 9.99999996E-13 : f32
    %103 = vector.broadcast %cst_32 : f32 to vector<16x1xf32>
    %104 = arith.addf %100, %103 : vector<16x1xf32>
    %105 = math.rsqrt %104 : vector<16x1xf32>
    %106 = vector.broadcast %105 : vector<16x1xf32> to vector<16x32xf32>
    %107 = arith.mulf %102, %106 : vector<16x32xf32>
    %108 = vector.broadcast %8 : vector<1x32xf32> to vector<16x32xf32>
    %109 = arith.mulf %107, %108 : vector<16x32xf32>
    %110 = vector.broadcast %9 : vector<1x32xf32> to vector<16x32xf32>
    %111 = arith.addf %109, %110 : vector<16x32xf32>
    %c0_33 = arith.constant 0 : index
    %c0_34 = arith.constant 0 : index
    %112 = vector.load %arg4[%c0_33, %c0_34] : memref<16x32xf32, #tpu.memory_space<vmem>>, vector<16x32xf32>
    tpu.vector_store %arg4[%c0_33, %c0_34], %111 {strides = array<i32>} : memref<16x32xf32, #tpu.memory_space<vmem>>, vector<16x32xf32>,
    return
  }
}

</mosaic_0001>

<llo_original>
// kernel: tpu_custom_call.1
$region0: #{tpu_custom_call.1}
  #allocation0 [shape = 'u32[]', space=smem, size = 0x4, offset = 0x4, fixed_abs, tag = 'smem constant byte address 0x4 - core index']
  #allocation1 [shape = 'u32[72,128]{1,0:T(1,128)}', space=vmem, size = 0x9000, scoped, tag = 'internal scratch']
  %s0 = inlined_call_operand.hbm [shape: f32[16,32], index: 0, kind: input, shape index: {}]
  %s1 = inlined_call_operand.hbm [shape: f32[32,128], index: 1, kind: input, shape index: {}]
  %s2 = inlined_call_operand.hbm [shape: f32[2,128], index: 2, kind: input, shape index: {}]
  %s3 = inlined_call_operand.hbm [shape: f32[16,16], index: 3, kind: input, shape index: {}]
  %s4 = inlined_call_operand.hbm [shape: f32[16,32], index: 4, kind: output, shape index: {}]
  %s5 = sld [smem:[#allocation0]]
  $region42: #{tpu_custom_call.1} parent=0
    _
  %s7 = ssub.s32 1, %s5
  %s8 = scalar_select 0, %s7, %s5
  $region1: #{tpu_custom_call.1} parent=0
    #allocation2 [shape = 'u8[8192]{0}', space=vmem, size = 0x2000, scoped, tag = 'input window, operand 0, single buffered']
    #allocation3 [shape = 's32[1]{0}', space=sflag, size = 0x4, scoped, tag = 'scoped memory for tpu_custom_call.1']
    #allocation4 [shape = 's32[1]{0}', space=sflag, size = 0x4, scoped, tag = 'scoped memory for tpu_custom_call.1']
    #allocation5 [shape = 'u8[16384]{0}', space=vmem, size = 0x4000, scoped, tag = 'input window, operand 1, single buffered']
    #allocation6 [shape = 's32[1]{0}', space=sflag, size = 0x4, scoped, tag = 'scoped memory for tpu_custom_call.1']
    #allocation7 [shape = 'u8[1024]{0}', space=vmem, size = 0x400, scoped, tag = 'input window, operand 2, single buffered']
    #allocation8 [shape = 'u8[8192]{0}', space=vmem, size = 0x2000, scoped, tag = 'input window, operand 3, single buffered']
    #allocation9 [shape = 's32[1]{0}', space=sflag, size = 0x4, scoped, tag = 'scoped memory for tpu_custom_call.1']
    #allocation10 [shape = 'u8[8192]{0}', space=vmem, size = 0x2000, scoped, tag = 'output window, operand 0, single buffered']
    %9 = vsyncpa [#allocation3], 0
    %10 = vsyncpa [#allocation6], 0
    %11 = vsyncpa [#allocation9], 0
    %12 = vsyncpa [#allocation4], 0
    // Predicated region
    $region2: #{tpu_custom_call.1} parent=1 // pred_check
      _
    $region3: #{tpu_custom_call.1} parent=1 // pred_check_branch
      %14 = sbr.rel (0) target = $region5
    $region4: #{tpu_custom_call.1} parent=1 // pred_region
      %16 = vsyncadd [#allocation3], 0
      %s17 = sshll.u32 %s0, 4
      %s18 = int_to_ptr.hbm [resolvable:$true] %s17
      %s19 = sshll.u32 [#allocation2], 4
      %s20 = int_to_ptr.vmem [resolvable:$true] %s19
      %25 = dma.hbm_to_vmem [thread:$0]  %s18, 256, %s20, [#allocation3], 128, 128, 8
    $region5: #{tpu_custom_call.1} parent=1 // pred_fallthru
      _
    // Predicated region
    $region6: #{tpu_custom_call.1} parent=1 // pred_check
      _
    $region7: #{tpu_custom_call.1} parent=1 // pred_check_branch
      %27 = sbr.rel (0) target = $region9
    $region8: #{tpu_custom_call.1} parent=1 // pred_region
      %29 = vsyncadd [#allocation6], 0
      %s30 = sshll.u32 %s1, 4
      %s31 = int_to_ptr.hbm [resolvable:$true] %s30
      %s32 = sshll.u32 [#allocation5], 4
      %s33 = int_to_ptr.vmem [resolvable:$true] %s32
      %38 = dma.hbm_to_vmem [thread:$0]  %s31, 512, %s33, [#allocation6], 128, 128, 8
    $region9: #{tpu_custom_call.1} parent=1 // pred_fallthru
      _
    // Predicated region
    $region10: #{tpu_custom_call.1} parent=1 // pred_check
      _
    $region11: #{tpu_custom_call.1} parent=1 // pred_check_branch
      %40 = sbr.rel (0) target = $region13
    $region12: #{tpu_custom_call.1} parent=1 // pred_region
      %42 = vsyncadd [#allocation6], 0
      %s44 = sshll.u32 %s2, 4
      %s45 = int_to_ptr.hbm [resolvable:$true] %s44
      %s46 = sshll.u32 [#allocation7], 4
      %s47 = int_to_ptr.vmem [resolvable:$true] %s46
      %49 = dma.hbm_to_vmem [thread:$0]  %s45, 32, %s47, [#allocation6]
    $region13: #{tpu_custom_call.1} parent=1 // pred_fallthru
      _
    // Predicated region
    $region14: #{tpu_custom_call.1} parent=1 // pred_check
      _
    $region15: #{tpu_custom_call.1} parent=1 // pred_check_branch
      %51 = sbr.rel (0) target = $region17
    $region16: #{tpu_custom_call.1} parent=1 // pred_region
      %53 = vsyncadd [#allocation9], 0
      %s54 = sshll.u32 %s3, 4
      %s55 = int_to_ptr.hbm [resolvable:$true] %s54
      %s56 = sshll.u32 [#allocation8], 4
      %s57 = int_to_ptr.vmem [resolvable:$true] %s56
      %62 = dma.hbm_to_vmem [thread:$0]  %s55, 256, %s57, [#allocation9], 128, 128, 8
    $region17: #{tpu_custom_call.1} parent=1 // pred_fallthru
      _
    // Predicated region
    $region18: #{tpu_custom_call.1} parent=1 // pred_check
      _
    $region19: #{tpu_custom_call.1} parent=1 // pred_check_branch
      %64 = sbr.rel (0) target = $region21
    $region20: #{tpu_custom_call.1} parent=1 // pred_region
      %66 = dma.done [#allocation3], 256
    $region21: #{tpu_custom_call.1} parent=1 // pred_fallthru
      _
    // Predicated region
    $region22: #{tpu_custom_call.1} parent=1 // pred_check
      _
    $region23: #{tpu_custom_call.1} parent=1 // pred_check_branch
      %68 = sbr.rel (0) target = $region25
    $region24: #{tpu_custom_call.1} parent=1 // pred_region
      %70 = dma.done [#allocation6], 512
    $region25: #{tpu_custom_call.1} parent=1 // pred_fallthru
      _
    // Predicated region
    $region26: #{tpu_custom_call.1} parent=1 // pred_check
      _
    $region27: #{tpu_custom_call.1} parent=1 // pred_check_branch
      %72 = sbr.rel (0) target = $region29
    $region28: #{tpu_custom_call.1} parent=1 // pred_region
      %74 = dma.done [#allocation6], 32
    $region29: #{tpu_custom_call.1} parent=1 // pred_fallthru
      _
    // Predicated region
    $region30: #{tpu_custom_call.1} parent=1 // pred_check
      _
    $region31: #{tpu_custom_call.1} parent=1 // pred_check_branch
      %76 = sbr.rel (0) target = $region33
    $region32: #{tpu_custom_call.1} parent=1 // pred_region
      %78 = dma.done [#allocation9], 256
    $region33: #{tpu_custom_call.1} parent=1 // pred_fallthru
      _
    %v79 = vld [vmem:[#allocation2] sm:$0xff]
    %v80 = vld [vmem:[#allocation2 + $0x8] sm:$0xff]
    %v81 = vld [vmem:[#allocation5] sm:$0xff]
    %v82 = vld [vmem:[#allocation5 + $0x8] sm:$0xff]
    %v83 = vld [vmem:[#allocation5 + $0x10] sm:$0xff]
    %v84 = vld [vmem:[#allocation5 + $0x18] sm:$0xff]
    %v85 = vld [vmem:[#allocation7] sm:$0x3]
    %v86 = vld [vmem:[#allocation8] sm:$0xff]
    %v87 = vld [vmem:[#allocation8 + $0x8] sm:$0xff]
    %v88 = vperm.slane %v85, 0
    %vm89 = vcmask 261120
    %v91 = vsel %vm89, %v79, 0
    %v94 = vsel %vm89, %v80, 0
    %96 = vmatpush.msra.mxu0 0.0
    %97 = vmatpush.msra.mxu0 0.0
    %98 = vmatpush.msra.mxu0 0.0
    %99 = vmatpush.msra.mxu0 0.0
    %100 = vmatpush.msra.mxu0 0.0
    %101 = vmatpush.msra.mxu0 0.0
    %102 = vmatpush.msra.mxu0 0.0
    %103 = vmatpush.msra.mxu0 0.0
    %104 = vmatpush.msra.mxu0 0.0
    %105 = vmatpush.msra.mxu0 0.0
    %106 = vmatpush.msra.mxu0 0.0
    %107 = vmatpush.msra.mxu0 0.0
    %108 = vmatpush.msra.mxu0 %v84
    %109 = vmatpush.msra.mxu0 %v83
    %110 = vmatpush.msra.mxu0 %v82
    %111 = vmatpush.msra.mxu0 %v81
    %112 = vmatmul.f32.gmra.mxu0 %v91
    %v113 = vpop.f32.mrf.mxu0
    %v114 = vadd.f32 %v88, %v113
    %115 = vmatmul.f32.gmra.mxu0 %v94
    %v116 = vpop.f32.mrf.mxu0
    %v117 = vadd.f32 %v88, %v116
    %118 = vdwg.mxu0
    %121 = vrot.lane.b32.xlu0 %v114, 96
    %v122 = vpop.permute.xlu0 %121
    %123 = vrot.lane.b32.xlu0 %v117, 96
    %v124 = vpop.permute.xlu0 %123
    %vm125 = vcmask 64512
    %v126 = vsel %vm125, %v114, 0
    %v128 = vsel %vm125, %v117, 0
    %v130 = vsel %vm125, %v122, 0
    %v132 = vsel %vm125, %v124, 0
    %134 = vmatpush.xpose.msra.mxu0 0.0
    %135 = vmatpush.xpose.msra.mxu0 0.0
    %136 = vmatpush.xpose.msra.mxu0 0.0
    %137 = vmatpush.xpose.msra.mxu0 0.0
    %138 = vmatpush.xpose.msra.mxu0 0.0
    %139 = vmatpush.xpose.msra.mxu0 0.0
    %140 = vmatpush.xpose.msra.mxu0 0.0
    %141 = vmatpush.xpose.msra.mxu0 0.0
    %142 = vmatpush.xpose.msra.mxu0 0.0
    %143 = vmatpush.xpose.msra.mxu0 0.0
    %144 = vmatpush.xpose.msra.mxu0 0.0
    %145 = vmatpush.xpose.msra.mxu0 0.0
    %146 = vmatpush.xpose.msra.mxu0 0.0
    %147 = vmatpush.xpose.msra.mxu0 0.0
    %148 = vmatpush.xpose.msra.mxu0 %v132
    %149 = vmatpush.xpose.msra.mxu0 %v130
    %150 = vmatmul.f32.gmra.mxu0 %v126
    %v151 = vpop.f32.mrf.mxu0
    %v152 = vadd.f32 0.0, %v151
    %153 = vmatmul.f32.gmra.mxu0 %v128
    %v154 = vpop.f32.mrf.mxu0
    %v155 = vadd.f32 0.0, %v154
    %156 = vdwg.mxu0
    %v157 = vmul.f32 %v152, 0.35355338
    %v158 = vmul.f32 %v155, 0.35355338
    %v159 = vadd.f32 %v157, %v86
    %v160 = vadd.f32 %v158, %v87
    %vm161 = vcmask 130048
    %v162 = vsel %vm161, %v159, -inf
    %163 = vmax.xlane.f32.xlu0 %v162
    %v164 = vpop.xlane.xlu0 %163
    %v165 = vsel %vm161, %v160, -inf
    %166 = vmax.xlane.f32.xlu0 %v165
    %v167 = vpop.xlane.xlu0 %166
    %v168 = vsub.f32 %v159, %v164
    %v169 = vsub.f32 %v160, %v167
    %v170 = vmul.f32 %v168, 1.442695
    %v171 = vpow.pop %v170
    %v172 = vmul.f32 %v169, 1.442695
    %v173 = vpow.pop %v172
    %v174 = vsel %vm161, %v171, 0.0
    %175 = vadd.xlane.f32.xlu0 %v174
    %v176 = vpop.xlane.xlu0 %175
    %v177 = vsel %vm161, %v173, 0.0
    %178 = vadd.xlane.f32.xlu0 %v177
    %v179 = vpop.xlane.xlu0 %178
    %v180 = vrcp.pop %v176
    %v181 = vmul.f32 %v176, %v180
    %v182 = vsub.f32 1.0, %v181
    %v183 = vmul.f32 %v180, %v182
    %v184 = vadd.f32 %v180, %v183
    %vm185 = vweird.f32 %v176
    %vm186 = vweird.f32 %v180
    %vm187 = vmor %vm185, %vm186
    %v188 = vsel %vm187, %v180, %v184
    %v189 = vand.u32 2147483647, %v176
    %vm190 = vcmp.eq.f32.partialorder %v189, 8.507059e+37
    %v191 = vand.u32 %v176, 2147483648
    %v192 = vor.u32 1.1754944e-38, %v191
    %v193 = vsel %vm190, %v192, %v188
    %v194 = vrcp.pop %v179
    %v195 = vmul.f32 %v179, %v194
    %v196 = vsub.f32 1.0, %v195
    %v197 = vmul.f32 %v194, %v196
    %v198 = vadd.f32 %v194, %v197
    %vm199 = vweird.f32 %v179
    %vm200 = vweird.f32 %v194
    %vm201 = vmor %vm199, %vm200
    %v202 = vsel %vm201, %v194, %v198
    %v203 = vand.u32 2147483647, %v179
    %vm204 = vcmp.eq.f32.partialorder %v203, 8.507059e+37
    %v205 = vand.u32 %v179, 2147483648
    %v206 = vor.u32 1.1754944e-38, %v205
    %v207 = vsel %vm204, %v206, %v202
    %v208 = vmul.f32 %v171, %v193
    %v209 = vmul.f32 %v173, %v207
    %210 = vrot.lane.b32.xlu0 %v114, 64
    %v211 = vpop.permute.xlu0 %210
    %212 = vrot.lane.b32.xlu0 %v117, 64
    %v213 = vpop.permute.xlu0 %212
    %v217 = vsel %vm161, %v208, 0
    %v220 = vsel %vm161, %v209, 0
    %222 = vmatpush.msra.mxu0 0.0
    %223 = vmatpush.msra.mxu0 0.0
    %224 = vmatpush.msra.mxu0 0.0
    %225 = vmatpush.msra.mxu0 0.0
    %226 = vmatpush.msra.mxu0 0.0
    %227 = vmatpush.msra.mxu0 0.0
    %228 = vmatpush.msra.mxu0 0.0
    %229 = vmatpush.msra.mxu0 0.0
    %230 = vmatpush.msra.mxu0 0.0
    %231 = vmatpush.msra.mxu0 0.0
    %232 = vmatpush.msra.mxu0 0.0
    %233 = vmatpush.msra.mxu0 0.0
    %234 = vmatpush.msra.mxu0 0.0
    %235 = vmatpush.msra.mxu0 0.0
    %236 = vmatpush.msra.mxu0 %v213
    %237 = vmatpush.msra.mxu0 %v211
    %238 = vmatmul.f32.gmra.mxu0 %v217
    %v239 = vpop.f32.mrf.mxu0
    %v240 = vadd.f32 0.0, %v239
    %241 = vmatmul.f32.gmra.mxu0 %v220
    %v242 = vpop.f32.mrf.mxu0
    %v243 = vadd.f32 0.0, %v242
    %244 = vdwg.mxu0
    %245 = vrot.lane.b32.xlu0 %v114, 120
    %v246 = vpop.permute.xlu0 %245
    %247 = vrot.lane.b32.xlu0 %v117, 120
    %v248 = vpop.permute.xlu0 %247
    %249 = vrot.lane.b32.xlu0 %v114, 88
    %v250 = vpop.permute.xlu0 %249
    %251 = vrot.lane.b32.xlu0 %v117, 88
    %v252 = vpop.permute.xlu0 %251
    %v253 = vsel %vm125, %v246, 0
    %v255 = vsel %vm125, %v248, 0
    %v257 = vsel %vm125, %v250, 0
    %v259 = vsel %vm125, %v252, 0
    %261 = vmatpush.xpose.msra.mxu0 0.0
    %262 = vmatpush.xpose.msra.mxu0 0.0
    %263 = vmatpush.xpose.msra.mxu0 0.0
    %264 = vmatpush.xpose.msra.mxu0 0.0
    %265 = vmatpush.xpose.msra.mxu0 0.0
    %266 = vmatpush.xpose.msra.mxu0 0.0
    %267 = vmatpush.xpose.msra.mxu0 0.0
    %268 = vmatpush.xpose.msra.mxu0 0.0
    %269 = vmatpush.xpose.msra.mxu0 0.0
    %270 = vmatpush.xpose.msra.mxu0 0.0
    %271 = vmatpush.xpose.msra.mxu0 0.0
    %272 = vmatpush.xpose.msra.mxu0 0.0
    %273 = vmatpush.xpose.msra.mxu0 0.0
    %274 = vmatpush.xpose.msra.mxu0 0.0
    %275 = vmatpush.xpose.msra.mxu0 %v259
    %276 = vmatpush.xpose.msra.mxu0 %v257
    %277 = vmatmul.f32.gmra.mxu0 %v253
    %v278 = vpop.f32.mrf.mxu0
    %v279 = vadd.f32 0.0, %v278
    %280 = vmatmul.f32.gmra.mxu0 %v255
    %v281 = vpop.f32.mrf.mxu0
    %v282 = vadd.f32 0.0, %v281
    %283 = vdwg.mxu0
    %v284 = vmul.f32 %v279, 0.35355338
    %v285 = vmul.f32 %v282, 0.35355338
    %v286 = vadd.f32 %v284, %v86
    %v287 = vadd.f32 %v285, %v87
    %v288 = vsel %vm161, %v286, -inf
    %289 = vmax.xlane.f32.xlu0 %v288
    %v290 = vpop.xlane.xlu0 %289
    %v291 = vsel %vm161, %v287, -inf
    %292 = vmax.xlane.f32.xlu0 %v291
    %v293 = vpop.xlane.xlu0 %292
    %v294 = vsub.f32 %v286, %v290
    %v295 = vsub.f32 %v287, %v293
    %v296 = vmul.f32 %v294, 1.442695
    %v297 = vpow.pop %v296
    %v298 = vmul.f32 %v295, 1.442695
    %v299 = vpow.pop %v298
    %v300 = vsel %vm161, %v297, 0.0
    %301 = vadd.xlane.f32.xlu0 %v300
    %v302 = vpop.xlane.xlu0 %301
    %v303 = vsel %vm161, %v299, 0.0
    %304 = vadd.xlane.f32.xlu0 %v303
    %v305 = vpop.xlane.xlu0 %304
    %v306 = vrcp.pop %v302
    %v307 = vmul.f32 %v302, %v306
    %v308 = vsub.f32 1.0, %v307
    %v309 = vmul.f32 %v306, %v308
    %v310 = vadd.f32 %v306, %v309
    %vm311 = vweird.f32 %v302
    %vm312 = vweird.f32 %v306
    %vm313 = vmor %vm311, %vm312
    %v314 = vsel %vm313, %v306, %v310
    %v315 = vand.u32 2147483647, %v302
    %vm316 = vcmp.eq.f32.partialorder %v315, 8.507059e+37
    %v317 = vand.u32 %v302, 2147483648
    %v318 = vor.u32 1.1754944e-38, %v317
    %v319 = vsel %vm316, %v318, %v314
    %v320 = vrcp.pop %v305
    %v321 = vmul.f32 %v305, %v320
    %v322 = vsub.f32 1.0, %v321
    %v323 = vmul.f32 %v320, %v322
    %v324 = vadd.f32 %v320, %v323
    %vm325 = vweird.f32 %v305
    %vm326 = vweird.f32 %v320
    %vm327 = vmor %vm325, %vm326
    %v328 = vsel %vm327, %v320, %v324
    %v329 = vand.u32 2147483647, %v305
    %vm330 = vcmp.eq.f32.partialorder %v329, 8.507059e+37
    %v331 = vand.u32 %v305, 2147483648
    %v332 = vor.u32 1.1754944e-38, %v331
    %v333 = vsel %vm330, %v332, %v328
    %v334 = vmul.f32 %v297, %v319
    %v335 = vmul.f32 %v299, %v333
    %336 = vrot.lane.b32.xlu0 %v114, 56
    %v337 = vpop.permute.xlu0 %336
    %338 = vrot.lane.b32.xlu0 %v117, 56
    %v339 = vpop.permute.xlu0 %338
    %v343 = vsel %vm161, %v334, 0
    %v346 = vsel %vm161, %v335, 0
    %348 = vmatpush.msra.mxu0 0.0
    %349 = vmatpush.msra.mxu0 0.0
    %350 = vmatpush.msra.mxu0 0.0
    %351 = vmatpush.msra.mxu0 0.0
    %352 = vmatpush.msra.mxu0 0.0
    %353 = vmatpush.msra.mxu0 0.0
    %354 = vmatpush.msra.mxu0 0.0
    %355 = vmatpush.msra.mxu0 0.0
    %356 = vmatpush.msra.mxu0 0.0
    %357 = vmatpush.msra.mxu0 0.0
    %358 = vmatpush.msra.mxu0 0.0
    %359 = vmatpush.msra.mxu0 0.0
    %360 = vmatpush.msra.mxu0 0.0
    %361 = vmatpush.msra.mxu0 0.0
    %362 = vmatpush.msra.mxu0 %v339
    %363 = vmatpush.msra.mxu0 %v337
    %364 = vmatmul.f32.gmra.mxu0 %v343
    %v365 = vpop.f32.mrf.mxu0
    %v366 = vadd.f32 0.0, %v365
    %367 = vmatmul.f32.gmra.mxu0 %v346
    %v368 = vpop.f32.mrf.mxu0
    %v369 = vadd.f32 0.0, %v368
    %370 = vdwg.mxu0
    %371 = vrot.lane.b32.xlu0 %v114, 112
    %v372 = vpop.permute.xlu0 %371
    %373 = vrot.lane.b32.xlu0 %v117, 112
    %v374 = vpop.permute.xlu0 %373
    %375 = vrot.lane.b32.xlu0 %v114, 80
    %v376 = vpop.permute.xlu0 %375
    %377 = vrot.lane.b32.xlu0 %v117, 80
    %v378 = vpop.permute.xlu0 %377
    %v379 = vsel %vm125, %v372, 0
    %v381 = vsel %vm125, %v374, 0
    %v383 = vsel %vm125, %v376, 0
    %v385 = vsel %vm125, %v378, 0
    %387 = vmatpush.xpose.msra.mxu0 0.0
    %388 = vmatpush.xpose.msra.mxu0 0.0
    %389 = vmatpush.xpose.msra.mxu0 0.0
    %390 = vmatpush.xpose.msra.mxu0 0.0
    %391 = vmatpush.xpose.msra.mxu0 0.0
    %392 = vmatpush.xpose.msra.mxu0 0.0
    %393 = vmatpush.xpose.msra.mxu0 0.0
    %394 = vmatpush.xpose.msra.mxu0 0.0
    %395 = vmatpush.xpose.msra.mxu0 0.0
    %396 = vmatpush.xpose.msra.mxu0 0.0
    %397 = vmatpush.xpose.msra.mxu0 0.0
    %398 = vmatpush.xpose.msra.mxu0 0.0
    %399 = vmatpush.xpose.msra.mxu0 0.0
    %400 = vmatpush.xpose.msra.mxu0 0.0
    %401 = vmatpush.xpose.msra.mxu0 %v385
    %402 = vmatpush.xpose.msra.mxu0 %v383
    %403 = vmatmul.f32.gmra.mxu0 %v379
    %v404 = vpop.f32.mrf.mxu0
    %v405 = vadd.f32 0.0, %v404
    %406 = vmatmul.f32.gmra.mxu0 %v381
    %v407 = vpop.f32.mrf.mxu0
    %v408 = vadd.f32 0.0, %v407
    %409 = vdwg.mxu0
    %v410 = vmul.f32 %v405, 0.35355338
    %v411 = vmul.f32 %v408, 0.35355338
    %v412 = vadd.f32 %v410, %v86
    %v413 = vadd.f32 %v411, %v87
    %v414 = vsel %vm161, %v412, -inf
    %415 = vmax.xlane.f32.xlu0 %v414
    %v416 = vpop.xlane.xlu0 %415
    %v417 = vsel %vm161, %v413, -inf
    %418 = vmax.xlane.f32.xlu0 %v417
    %v419 = vpop.xlane.xlu0 %418
    %v420 = vsub.f32 %v412, %v416
    %v421 = vsub.f32 %v413, %v419
    %v422 = vmul.f32 %v420, 1.442695
    %v423 = vpow.pop %v422
    %v424 = vmul.f32 %v421, 1.442695
    %v425 = vpow.pop %v424
    %v426 = vsel %vm161, %v423, 0.0
    %427 = vadd.xlane.f32.xlu0 %v426
    %v428 = vpop.xlane.xlu0 %427
    %v429 = vsel %vm161, %v425, 0.0
    %430 = vadd.xlane.f32.xlu0 %v429
    %v431 = vpop.xlane.xlu0 %430
    %v432 = vrcp.pop %v428
    %v433 = vmul.f32 %v428, %v432
    %v434 = vsub.f32 1.0, %v433
    %v435 = vmul.f32 %v432, %v434
    %v436 = vadd.f32 %v432, %v435
    %vm437 = vweird.f32 %v428
    %vm438 = vweird.f32 %v432
    %vm439 = vmor %vm437, %vm438
    %v440 = vsel %vm439, %v432, %v436
    %v441 = vand.u32 2147483647, %v428
    %vm442 = vcmp.eq.f32.partialorder %v441, 8.507059e+37
    %v443 = vand.u32 %v428, 2147483648
    %v444 = vor.u32 1.1754944e-38, %v443
    %v445 = vsel %vm442, %v444, %v440
    %v446 = vrcp.pop %v431
    %v447 = vmul.f32 %v431, %v446
    %v448 = vsub.f32 1.0, %v447
    %v449 = vmul.f32 %v446, %v448
    %v450 = vadd.f32 %v446, %v449
    %vm451 = vweird.f32 %v431
    %vm452 = vweird.f32 %v446
    %vm453 = vmor %vm451, %vm452
    %v454 = vsel %vm453, %v446, %v450
    %v455 = vand.u32 2147483647, %v431
    %vm456 = vcmp.eq.f32.partialorder %v455, 8.507059e+37
    %v457 = vand.u32 %v431, 2147483648
    %v458 = vor.u32 1.1754944e-38, %v457
    %v459 = vsel %vm456, %v458, %v454
    %v460 = vmul.f32 %v423, %v445
    %v461 = vmul.f32 %v425, %v459
    %462 = vrot.lane.b32.xlu0 %v114, 48
    %v463 = vpop.permute.xlu0 %462
    %464 = vrot.lane.b32.xlu0 %v117, 48
    %v465 = vpop.permute.xlu0 %464
    %v469 = vsel %vm161, %v460, 0
    %v472 = vsel %vm161, %v461, 0
    %474 = vmatpush.msra.mxu0 0.0
    %475 = vmatpush.msra.mxu0 0.0
    %476 = vmatpush.msra.mxu0 0.0
    %477 = vmatpush.msra.mxu0 0.0
    %478 = vmatpush.msra.mxu0 0.0
    %479 = vmatpush.msra.mxu0 0.0
    %480 = vmatpush.msra.mxu0 0.0
    %481 = vmatpush.msra.mxu0 0.0
    %482 = vmatpush.msra.mxu0 0.0
    %483 = vmatpush.msra.mxu0 0.0
    %484 = vmatpush.msra.mxu0 0.0
    %485 = vmatpush.msra.mxu0 0.0
    %486 = vmatpush.msra.mxu0 0.0
    %487 = vmatpush.msra.mxu0 0.0
    %488 = vmatpush.msra.mxu0 %v465
    %489 = vmatpush.msra.mxu0 %v463
    %490 = vmatmul.f32.gmra.mxu0 %v469
    %v491 = vpop.f32.mrf.mxu0
    %v492 = vadd.f32 0.0, %v491
    %493 = vmatmul.f32.gmra.mxu0 %v472
    %v494 = vpop.f32.mrf.mxu0
    %v495 = vadd.f32 0.0, %v494
    %496 = vdwg.mxu0
    %497 = vrot.lane.b32.xlu0 %v114, 104
    %v498 = vpop.permute.xlu0 %497
    %499 = vrot.lane.b32.xlu0 %v117, 104
    %v500 = vpop.permute.xlu0 %499
    %501 = vrot.lane.b32.xlu0 %v114, 72
    %v502 = vpop.permute.xlu0 %501
    %503 = vrot.lane.b32.xlu0 %v117, 72
    %v504 = vpop.permute.xlu0 %503
    %v505 = vsel %vm125, %v498, 0
    %v507 = vsel %vm125, %v500, 0
    %v509 = vsel %vm125, %v502, 0
    %v511 = vsel %vm125, %v504, 0
    %513 = vmatpush.xpose.msra.mxu0 0.0
    %514 = vmatpush.xpose.msra.mxu0 0.0
    %515 = vmatpush.xpose.msra.mxu0 0.0
    %516 = vmatpush.xpose.msra.mxu0 0.0
    %517 = vmatpush.xpose.msra.mxu0 0.0
    %518 = vmatpush.xpose.msra.mxu0 0.0
    %519 = vmatpush.xpose.msra.mxu0 0.0
    %520 = vmatpush.xpose.msra.mxu0 0.0
    %521 = vmatpush.xpose.msra.mxu0 0.0
    %522 = vmatpush.xpose.msra.mxu0 0.0
    %523 = vmatpush.xpose.msra.mxu0 0.0
    %524 = vmatpush.xpose.msra.mxu0 0.0
    %525 = vmatpush.xpose.msra.mxu0 0.0
    %526 = vmatpush.xpose.msra.mxu0 0.0
    %527 = vmatpush.xpose.msra.mxu0 %v511
    %528 = vmatpush.xpose.msra.mxu0 %v509
    %529 = vmatmul.f32.gmra.mxu0 %v505
    %v530 = vpop.f32.mrf.mxu0
    %v531 = vadd.f32 0.0, %v530
    %532 = vmatmul.f32.gmra.mxu0 %v507
    %v533 = vpop.f32.mrf.mxu0
    %v534 = vadd.f32 0.0, %v533
    %535 = vdwg.mxu0
    %v536 = vmul.f32 %v531, 0.35355338
    %v537 = vmul.f32 %v534, 0.35355338
    %v538 = vadd.f32 %v536, %v86
    %v539 = vadd.f32 %v537, %v87
    %v540 = vsel %vm161, %v538, -inf
    %541 = vmax.xlane.f32.xlu0 %v540
    %v542 = vpop.xlane.xlu0 %541
    %v543 = vsel %vm161, %v539, -inf
    %544 = vmax.xlane.f32.xlu0 %v543
    %v545 = vpop.xlane.xlu0 %544
    %v546 = vsub.f32 %v538, %v542
    %v547 = vsub.f32 %v539, %v545
    %v548 = vmul.f32 %v546, 1.442695
    %v549 = vpow.pop %v548
    %v550 = vmul.f32 %v547, 1.442695
    %v551 = vpow.pop %v550
    %v552 = vsel %vm161, %v549, 0.0
    %553 = vadd.xlane.f32.xlu0 %v552
    %v554 = vpop.xlane.xlu0 %553
    %v555 = vsel %vm161, %v551, 0.0
    %556 = vadd.xlane.f32.xlu0 %v555
    %v557 = vpop.xlane.xlu0 %556
    %v558 = vrcp.pop %v554
    %v559 = vmul.f32 %v554, %v558
    %v560 = vsub.f32 1.0, %v559
    %v561 = vmul.f32 %v558, %v560
    %v562 = vadd.f32 %v558, %v561
    %vm563 = vweird.f32 %v554
    %vm564 = vweird.f32 %v558
    %vm565 = vmor %vm563, %vm564
    %v566 = vsel %vm565, %v558, %v562
    %v567 = vand.u32 2147483647, %v554
    %vm568 = vcmp.eq.f32.partialorder %v567, 8.507059e+37
    %v569 = vand.u32 %v554, 2147483648
    %v570 = vor.u32 1.1754944e-38, %v569
    %v571 = vsel %vm568, %v570, %v566
    %v572 = vrcp.pop %v557
    %v573 = vmul.f32 %v557, %v572
    %v574 = vsub.f32 1.0, %v573
    %v575 = vmul.f32 %v572, %v574
    %v576 = vadd.f32 %v572, %v575
    %vm577 = vweird.f32 %v557
    %vm578 = vweird.f32 %v572
    %vm579 = vmor %vm577, %vm578
    %v580 = vsel %vm579, %v572, %v576
    %v581 = vand.u32 2147483647, %v557
    %vm582 = vcmp.eq.f32.partialorder %v581, 8.507059e+37
    %v583 = vand.u32 %v557, 2147483648
    %v584 = vor.u32 1.1754944e-38, %v583
    %v585 = vsel %vm582, %v584, %v580
    %v586 = vmul.f32 %v549, %v571
    %v587 = vmul.f32 %v551, %v585
    %588 = vrot.lane.b32.xlu0 %v114, 40
    %v589 = vpop.permute.xlu0 %588
    %590 = vrot.lane.b32.xlu0 %v117, 40
    %v591 = vpop.permute.xlu0 %590
    %v595 = vsel %vm161, %v586, 0
    %v598 = vsel %vm161, %v587, 0
    %600 = vmatpush.msra.mxu0 0.0
    %601 = vmatpush.msra.mxu0 0.0
    %602 = vmatpush.msra.mxu0 0.0
    %603 = vmatpush.msra.mxu0 0.0
    %604 = vmatpush.msra.mxu0 0.0
    %605 = vmatpush.msra.mxu0 0.0
    %606 = vmatpush.msra.mxu0 0.0
    %607 = vmatpush.msra.mxu0 0.0
    %608 = vmatpush.msra.mxu0 0.0
    %609 = vmatpush.msra.mxu0 0.0
    %610 = vmatpush.msra.mxu0 0.0
    %611 = vmatpush.msra.mxu0 0.0
    %612 = vmatpush.msra.mxu0 0.0
    %613 = vmatpush.msra.mxu0 0.0
    %614 = vmatpush.msra.mxu0 %v591
    %615 = vmatpush.msra.mxu0 %v589
    %616 = vmatmul.f32.gmra.mxu0 %v595
    %v617 = vpop.f32.mrf.mxu0
    %v618 = vadd.f32 0.0, %v617
    %619 = vmatmul.f32.gmra.mxu0 %v598
    %v620 = vpop.f32.mrf.mxu0
    %v621 = vadd.f32 0.0, %v620
    %622 = vdwg.mxu0
    %625 = vrot.lane.b32.xlu0 %v366, 8
    %v626 = vpop.permute.xlu0 %625
    %627 = vrot.lane.b32.xlu0 %v369, 8
    %v628 = vpop.permute.xlu0 %627
    %633 = vrot.lane.b32.xlu0 %v492, 16
    %v634 = vpop.permute.xlu0 %633
    %635 = vrot.lane.b32.xlu0 %v495, 16
    %v636 = vpop.permute.xlu0 %635
    %641 = vrot.lane.b32.xlu0 %v618, 24
    %v642 = vpop.permute.xlu0 %641
    %643 = vrot.lane.b32.xlu0 %v621, 24
    %v644 = vpop.permute.xlu0 %643
    %v647 = vsel %vm125, %v240, %v626
    %v648 = vsel %vm125, %v243, %v628
    %v649 = vsel %vm161, %v647, %v634
    %v650 = vsel %vm161, %v648, %v636
    %vm651 = vcmask 195584
    %v652 = vsel %vm651, %v649, %v642
    %v653 = vsel %vm651, %v650, %v644
    %658 = vrot.lane.b32.xlu0 %v81, 32
    %v659 = vpop.permute.xlu0 %658
    %660 = vrot.lane.b32.xlu0 %v82, 32
    %v661 = vpop.permute.xlu0 %660
    %662 = vrot.lane.b32.xlu0 %v83, 32
    %v663 = vpop.permute.xlu0 %662
    %664 = vrot.lane.b32.xlu0 %v84, 32
    %v665 = vpop.permute.xlu0 %664
    %671 = vrot.lane.b32.xlu0 %v88, 32
    %v672 = vpop.permute.xlu0 %671
    %v675 = vsel %vm89, %v652, 0
    %v678 = vsel %vm89, %v653, 0
    %680 = vmatpush.msra.mxu0 0.0
    %681 = vmatpush.msra.mxu0 0.0
    %682 = vmatpush.msra.mxu0 0.0
    %683 = vmatpush.msra.mxu0 0.0
    %684 = vmatpush.msra.mxu0 0.0
    %685 = vmatpush.msra.mxu0 0.0
    %686 = vmatpush.msra.mxu0 0.0
    %687 = vmatpush.msra.mxu0 0.0
    %688 = vmatpush.msra.mxu0 0.0
    %689 = vmatpush.msra.mxu0 0.0
    %690 = vmatpush.msra.mxu0 0.0
    %691 = vmatpush.msra.mxu0 0.0
    %692 = vmatpush.msra.mxu0 %v665
    %693 = vmatpush.msra.mxu0 %v663
    %694 = vmatpush.msra.mxu0 %v661
    %695 = vmatpush.msra.mxu0 %v659
    %696 = vmatmul.f32.gmra.mxu0 %v675
    %v697 = vpop.f32.mrf.mxu0
    %v698 = vadd.f32 %v672, %v697
    %699 = vmatmul.f32.gmra.mxu0 %v678
    %v700 = vpop.f32.mrf.mxu0
    %v701 = vadd.f32 %v672, %v700
    %702 = vdwg.mxu0
    %v703 = vadd.f32 %v698, %v79
    %v704 = vadd.f32 %v701, %v80
    %v705 = vsel %vm89, %v703, 0.0
    %706 = vadd.xlane.f32.xlu0 %v705
    %v707 = vpop.xlane.xlu0 %706
    %v708 = vsel %vm89, %v704, 0.0
    %709 = vadd.xlane.f32.xlu0 %v708
    %v710 = vpop.xlane.xlu0 %709
    %v711 = vrcp.pop 32.0
    %v712 = vmul.f32 32.0, %v711
    %v713 = vsub.f32 1.0, %v712
    %v714 = vmul.f32 %v711, %v713
    %v715 = vadd.f32 %v711, %v714
    %vm716 = vweird.f32 %v711
    %v717 = vsel %vm716, %v711, %v715
    %v718 = vmul.f32 %v707, %v717
    %v719 = vmul.f32 %v710, %v717
    %v720 = vsub.f32 %v703, %v718
    %v721 = vsub.f32 %v704, %v719
    %v722 = vmul.f32 %v720, %v720
    %v723 = vmul.f32 %v721, %v721
    %v724 = vsel %vm89, %v722, 0.0
    %725 = vadd.xlane.f32.xlu0 %v724
    %v726 = vpop.xlane.xlu0 %725
    %v727 = vsel %vm89, %v723, 0.0
    %728 = vadd.xlane.f32.xlu0 %v727
    %v729 = vpop.xlane.xlu0 %728
    %v730 = vmul.f32 %v726, %v717
    %v731 = vmul.f32 %v729, %v717
    %v732 = vadd.f32 %v730, 1e-12
    %v733 = vadd.f32 %v731, 1e-12
    %v734 = vrsqrt.pop %v732
    %v735 = vmul.f32 %v734, %v732
    %v736 = vmul.f32 %v735, %v734
    %v737 = vmul.f32 0.5, %v736
    %v738 = vsub.f32 1.5, %v737
    %v739 = vmul.f32 %v734, %v738
    %vm740 = vweird.f32 %v732
    %vm741 = vweird.f32 %v734
    %vm742 = vmor %vm740, %vm741
    %v743 = vsel %vm742, %v734, %v739
    %v744 = vrsqrt.pop %v733
    %v745 = vmul.f32 %v744, %v733
    %v746 = vmul.f32 %v745, %v744
    %v747 = vmul.f32 0.5, %v746
    %v748 = vsub.f32 1.5, %v747
    %v749 = vmul.f32 %v744, %v748
    %vm750 = vweird.f32 %v733
    %vm751 = vweird.f32 %v744
    %vm752 = vmor %vm750, %vm751
    %v753 = vsel %vm752, %v744, %v749
    %v754 = vmul.f32 %v720, %v743
    %v755 = vmul.f32 %v721, %v753
    %v756 = vperm.slane %v85, 1
    %v757 = vmul.f32 %v754, %v756
    %v758 = vmul.f32 %v755, %v756
    %760 = vrot.lane.b32.xlu0 %v756, 96
    %v761 = vpop.permute.xlu0 %760
    %v763 = vadd.f32 %v757, %v761
    %v764 = vadd.f32 %v758, %v761
    %765 = vst.msk [vmem:[#allocation10] sm:$0xff] %vm89, %v763
    %766 = vst.msk [vmem:[#allocation10 + $0x8] sm:$0xff] %vm89, %v764
    // Predicated region
    $region34: #{tpu_custom_call.1} parent=1 // pred_check
      _
    $region35: #{tpu_custom_call.1} parent=1 // pred_check_branch
      %768 = sbr.rel (0) target = $region37
    $region36: #{tpu_custom_call.1} parent=1 // pred_region
      %770 = vsyncadd [#allocation4], 0
      %s771 = sshll.u32 [#allocation10], 4
      %s772 = int_to_ptr.vmem [resolvable:$true] %s771
      %s773 = sshll.u32 %s4, 4
      %s774 = int_to_ptr.hbm [resolvable:$true] %s773
      %779 = dma.vmem_to_hbm [thread:$0]  %s772, 256, %s774, [#allocation4], 128, 128, 8
    $region37: #{tpu_custom_call.1} parent=1 // pred_fallthru
      _
    // Predicated region
    $region38: #{tpu_custom_call.1} parent=1 // pred_check
      _
    $region39: #{tpu_custom_call.1} parent=1 // pred_check_branch
      %781 = sbr.rel (0) target = $region41
    $region40: #{tpu_custom_call.1} parent=1 // pred_region
      %783 = dma.done [#allocation4], 256
    $region41: #{tpu_custom_call.1} parent=1 // pred_fallthru
      _
    %784 = vsyncpa [#allocation3], 1
    %785 = vsyncpa [#allocation6], 1
    %786 = vsyncpa [#allocation9], 1
    %787 = vsyncpa [#allocation4], 1

</llo_original>
